<compile_context>
chip_gen: v7x
topology: tpu7x:2x2x1
jax: 0.10.0
libtpu: 0.0.40
codegen_flags: <defaults>
</compile_context>

<pallas_src>
import math

import jax
import jax.numpy as jnp
from jax.experimental import pallas as pl
from jax.experimental.pallas import tpu as pltpu

LANE = 128
SUBLANE = 8


def _round_up(n, m):
    return ((n + m - 1) // m) * m


def _cdiv(a, b):
    return -(-a // b)


def _pad_to(a, shape):
    pads = [(0, t - s) for s, t in zip(a.shape, shape)]
    if any(p[1] for p in pads):
        a = jnp.pad(a, pads)
    return a


def _vmem_capacity_bytes():
    """Physical VMEM of the current chip; conservative 64 MiB (v7x) fallback."""
    try:
        cap = int(pltpu.get_tpu_info().vmem_capacity_bytes)
        if cap > 0:
            return cap
    except Exception:
        pass
    return 64 * 1024 * 1024


def _tpu_generation():
    """Best-effort chip generation (5/6/7); None if it cannot be determined."""
    try:
        info = pltpu.get_tpu_info()
    except Exception:
        return None
    for attr in ("chip_version", "version", "generation", "chip_name", "name"):
        val = getattr(info, attr, None)
        if val is None:
            continue
        for ch in str(val):
            if ch.isdigit():
                return int(ch)
    return None


def _make_mlp_kernel(num_linear, compute_dtype, act_dtype):
    """Kernel for `num_linear` stacked Linear layers, tanh after all but the
    last. refs = [x, (w, b) * num_linear, out].  All weights stay resident in
    VMEM across the (batch-tiled) grid."""

    def kernel(*refs):
        x_ref = refs[0]
        o_ref = refs[-1]

        h = x_ref[...]  # already compute_dtype (cast once in the wrapper)
        for li in range(num_linear):
            w_ref = refs[1 + 2 * li]
            b_ref = refs[2 + 2 * li]
            # MXU matmul with f32 accumulation; bias-add in f32.
            y = jnp.dot(h, w_ref[...],
                        preferred_element_type=jnp.float32) + b_ref[...]
            if li < num_linear - 1:
                # tanh on the EUP: bf16 on v6e/v7x, f32 on v5e/unknown chips.
                h = jnp.tanh(y.astype(act_dtype)).astype(compute_dtype)
            else:
                h = y
        o_ref[...] = h.astype(o_ref.dtype)

    return kernel


def mlp_minimal_forward(x, params, *, block_m=1024, compute_dtype=jnp.float32):
    """params: dict with
         'w_in'  (n_inputs, n_hidden), 'b_in'  (1, n_hidden)
         'w_hid' list of (n_hidden, n_hidden), 'b_hid' list of (1, n_hidden)
         'w_out' (n_hidden, n_outs),  'b_out' (1, n_outs)
       (weights pre-transposed to (in, out) vs the PyTorch (out, in) layout).
       compute_dtype=bf16 is profitable on ALL generations (v5e included):
       the MXU is bf16-native and accumulation/bias-add stay f32."""
    batch, n_inputs = x.shape
    n_hidden = params["w_in"].shape[1]
    n_outs = params["w_out"].shape[1]
    n_hid_layers = len(params["w_hid"])
    num_linear = n_hid_layers + 2
    out_dtype = x.dtype

    # ---- lane-pad feature dims to 128 (exact: zero padding) ----------------
    kp = _round_up(n_inputs, LANE)
    hp = _round_up(n_hidden, LANE)
    op = _round_up(n_outs, LANE)

    vmem_cap = _vmem_capacity_bytes()

    # If the resident f32 weight stack would eat more than ~1/3 of VMEM, drop
    # to bf16 weights/activations (f32 accumulate keeps accuracy) so it fits.
    compute_dtype = jnp.dtype(compute_dtype)
    weight_elems = kp * hp + n_hid_layers * hp * hp + hp * op
    if compute_dtype == jnp.dtype(jnp.float32) and weight_elems * 4 > vmem_cap // 3:
        compute_dtype = jnp.dtype(jnp.bfloat16)
    # TODO(synk): if even the bf16 weight stack exceeds ~1/3 of VMEM (very wide
    # n_hidden / deep nets on v7x's 64 MiB), tile the hidden weights over a
    # reduction grid axis with a pl.when-initialized f32 VMEM accumulator
    # instead of keeping the whole stack resident.

    is_bf16 = compute_dtype == jnp.dtype(jnp.bfloat16)
    gen = _tpu_generation()
    # bf16 tanh only where the EUP is bf16-native (v6e+); f32 otherwise.
    act_dtype = compute_dtype if (is_bf16 and gen is not None and gen >= 6) else jnp.float32

    layers = [(_pad_to(params["w_in"], (kp, hp)).astype(compute_dtype),
               _pad_to(params["b_in"], (1, hp)).astype(jnp.float32))]
    for w, b in zip(params["w_hid"], params["b_hid"]):
        layers.append((_pad_to(w, (hp, hp)).astype(compute_dtype),
                       _pad_to(b, (1, hp)).astype(jnp.float32)))
    layers.append((_pad_to(params["w_out"], (hp, op)).astype(compute_dtype),
                   _pad_to(params["b_out"], (1, op)).astype(jnp.float32)))

    # ---- batch tiling: balanced bm, even parallel step count ---------------
    sub = 16 if is_bf16 else SUBLANE          # full bf16 vreg packing = 16 rows
    block_m = _round_up(max(int(block_m), sub), sub)
    num_steps = _cdiv(batch, block_m)
    if num_steps == 1 and batch >= 2 * sub:
        num_steps = 2                          # give both v7x TensorCores work
    elif num_steps > 1 and num_steps % 2 == 1:
        num_steps += 1                         # even split across v7x's 2 TCs
    bm = _round_up(_cdiv(batch, num_steps), sub)   # balanced => minimal padding
    padded_batch = bm * num_steps
    grid = (num_steps,)

    x_pad = _pad_to(x, (padded_batch, kp)).astype(compute_dtype)
    args = [x_pad] + [t for wb in layers for t in wb]

    # ---- advisory cost estimate (logical, un-padded sizes) -----------------
    flops = 2 * batch * (n_inputs * n_hidden
                         + n_hid_layers * n_hidden * n_hidden
                         + n_hidden * n_outs)
    transcendentals = batch * n_hidden * (n_hid_layers + 1)
    bytes_accessed = (x_pad.size * x_pad.dtype.itemsize
                      + padded_batch * op * jnp.dtype(out_dtype).itemsize
                      + sum(w.size * w.dtype.itemsize + b.size * b.dtype.itemsize
                            for w, b in layers))
    cost = pl.CostEstimate(flops=flops, transcendentals=transcendentals,
                           bytes_accessed=bytes_accessed)

    kernel = _make_mlp_kernel(num_linear, compute_dtype, act_dtype)

    def _make_call(single_buffer_weights):
        # Constant-index weights/biases gain nothing from double buffering;
        # single-buffer them to halve their resident VMEM.
        wkw = ({"pipeline_mode": pl.Buffered(1)}
               if single_buffer_weights else {})
        in_specs = [pl.BlockSpec((bm, kp), lambda i: (i, 0))]
        for w, b in layers:
            in_specs.append(pl.BlockSpec(w.shape, lambda i: (0, 0), **wkw))
            in_specs.append(pl.BlockSpec(b.shape, lambda i: (0, 0), **wkw))
        out_specs = pl.BlockSpec((bm, op), lambda i: (i, 0))

        # Honest VMEM estimate: weights (x buffer count) + double-buffered
        # activation/output tiles + live per-layer f32 temporaries.
        wbuf = 1 if single_buffer_weights else 2
        weight_bytes = sum(w.size * w.dtype.itemsize + b.size * b.dtype.itemsize
                           for w, b in layers)
        io_bytes = 2 * bm * (kp * compute_dtype.itemsize
                             + op * jnp.dtype(out_dtype).itemsize)
        live_bytes = 3 * bm * max(kp, hp, op) * 4      # h_in, y (f32 acc), h_out
        est = wbuf * weight_bytes + io_bytes + live_bytes
        vmem_limit = int(min(max(int(1.5 * est), 32 * 1024 * 1024),
                             int(0.85 * vmem_cap)))

        return pl.pallas_call(
            kernel,
            out_shape=jax.ShapeDtypeStruct((padded_batch, op), out_dtype),
            grid_spec=pl.GridSpec(grid=grid, in_specs=in_specs,
                                  out_specs=out_specs),
            compiler_params=pltpu.CompilerParams(
                dimension_semantics=("parallel",),
                vmem_limit_bytes=vmem_limit),
            cost_estimate=cost,
        )

    try:
        out_padded = _make_call(True)(*args)
    except Exception:
        # Fallback for jax builds without pipeline_mode / Buffered(1) support:
        # identical math, just default (double) buffering of the weights.
        out_padded = _make_call(False)(*args)

    return out_padded[:batch, :n_outs]


def init_params(key, n_inputs, n_hidden, n_outs, n_layers):
    """Deterministic init mimicking PyTorch nn.Linear defaults
    (uniform(-1/sqrt(fan_in), 1/sqrt(fan_in)) for weight and bias).
    Weights are stored already transposed to (in, out)."""

    def linear(key, fan_in, fan_out):
        kw, kb = jax.random.split(key)
        bound = 1.0 / math.sqrt(fan_in)
        w = jax.random.uniform(kw, (fan_in, fan_out), jnp.float32,
                               minval=-bound, maxval=bound)
        b = jax.random.uniform(kb, (1, fan_out), jnp.float32,
                               minval=-bound, maxval=bound)
        return w, b

    keys = jax.random.split(key, n_layers + 1)
    w_in, b_in = linear(keys[0], n_inputs, n_hidden)
    w_hid, b_hid = [], []
    for li in range(n_layers - 1):
        w, b = linear(keys[1 + li], n_hidden, n_hidden)
        w_hid.append(w)
        b_hid.append(b)
    w_out, b_out = linear(keys[n_layers], n_hidden, n_outs)
    return {"w_in": w_in, "b_in": b_in,
            "w_hid": w_hid, "b_hid": b_hid,
            "w_out": w_out, "b_out": b_out}


def reference_forward(x, params):
    """Pure-JAX reference of MLP_minimal.forward (tanh activation)."""
    h = jnp.tanh(x @ params["w_in"] + params["b_in"])
    for w, b in zip(params["w_hid"], params["b_hid"]):
        h = jnp.tanh(h @ w + b)
    return h @ params["w_out"] + params["b_out"]


if __name__ == "__main__":
    # MLP_minimal(n_inputs=16, n_hidden=32, n_outs=8, n_layers=2, nl='tanh')
    batch, n_inputs, n_hidden, n_outs, n_layers = 8, 16, 32, 8, 2

    key = jax.random.PRNGKey(0)
    kx, kp_ = jax.random.split(key)
    x = jax.random.normal(kx, (batch, n_inputs), jnp.float32)
    params = init_params(kp_, n_inputs, n_hidden, n_outs, n_layers)
    ref = reference_forward(x, params)

    # f32 compute path (tight tolerance; lane/batch zero-padding is exact).
    out = jax.block_until_ready(mlp_minimal_forward(x, params))
    assert out.shape == (batch, n_outs)
    assert jnp.allclose(out, ref, atol=1e-5, rtol=1e-5), "f32 mismatch vs reference"

    # bf16 compute path (f32 accumulation; bf16 tanh only on v6e/v7x).
    out_bf16 = jax.block_until_ready(
        mlp_minimal_forward(x, params, compute_dtype=jnp.bfloat16))
    assert out_bf16.shape == (batch, n_outs)
    assert jnp.allclose(out_bf16, ref, atol=5e-2, rtol=5e-2), "bf16 mismatch"

    # Larger batch exercises the multi-step, even-parallel-grid path.
    xb = jax.random.normal(kx, (1024, n_inputs), jnp.float32)
    out_big = jax.block_until_ready(mlp_minimal_forward(xb, params))
    ref_big = reference_forward(xb, params)
    assert out_big.shape == (1024, n_outs)
    assert jnp.allclose(out_big, ref_big, atol=1e-5, rtol=1e-5), "big-batch mismatch"

    # Awkward batch exercises the balanced-bm (minimal zero-row padding) path.
    xo = jax.random.normal(kx, (520, n_inputs), jnp.float32)
    out_odd = jax.block_until_ready(mlp_minimal_forward(xo, params, block_m=512))
    ref_odd = reference_forward(xo, params)
    assert out_odd.shape == (520, n_outs)
    assert jnp.allclose(out_odd, ref_odd, atol=1e-5, rtol=1e-5), "odd-batch mismatch"

    print("KERNEL_OK")
</pallas_src>

<mosaic_0001>
module attributes {stable_mosaic.version = 11 : i64} {
  func.func @kernel(%arg0: i32, %arg1: memref<8x128xf32, #tpu.memory_space<vmem>>, %arg2: memref<128x128xf32, #tpu.memory_space<vmem>>, %arg3: memref<1x128xf32, #tpu.memory_space<vmem>>, %arg4: memref<128x128xf32, #tpu.memory_space<vmem>>, %arg5: memref<1x128xf32, #tpu.memory_space<vmem>>, %arg6: memref<128x128xf32, #tpu.memory_space<vmem>>, %arg7: memref<1x128xf32, #tpu.memory_space<vmem>>, %arg8: memref<8x128xf32, #tpu.memory_space<vmem>>) attributes {dimension_semantics = [#tpu.dimension_semantics<parallel>], iteration_bounds = array<i64: 1>, scalar_prefetch = 0 : i64, scratch_operands = 0 : i64, tpu.core_type = #tpu.core_type<tc>, window_params = [{transform_indices = @transform_0, window_bounds = array<i64: 8, 128>}, {pipeline_mode = #tpu.pipeline_mode<synchronous>, transform_indices = @transform_1, window_bounds = array<i64: 128, 128>}, {pipeline_mode = #tpu.pipeline_mode<synchronous>, transform_indices = @transform_2, window_bounds = array<i64: 1, 128>}, {pipeline_mode = #tpu.pipeline_mode<synchronous>, transform_indices = @transform_3, window_bounds = array<i64: 128, 128>}, {pipeline_mode = #tpu.pipeline_mode<synchronous>, transform_indices = @transform_4, window_bounds = array<i64: 1, 128>}, {pipeline_mode = #tpu.pipeline_mode<synchronous>, transform_indices = @transform_5, window_bounds = array<i64: 128, 128>}, {pipeline_mode = #tpu.pipeline_mode<synchronous>, transform_indices = @transform_6, window_bounds = array<i64: 1, 128>}, {transform_indices = @transform_7, window_bounds = array<i64: 8, 128>}]} {
    %c0 = arith.constant 0 : index
    %c0_0 = arith.constant 0 : index
    %0 = vector.load %arg1[%c0, %c0_0] : memref<8x128xf32, #tpu.memory_space<vmem>>, vector<8x128xf32>
    %c0_1 = arith.constant 0 : index
    %c0_2 = arith.constant 0 : index
    %1 = vector.load %arg2[%c0_1, %c0_2] : memref<128x128xf32, #tpu.memory_space<vmem>>, vector<128x128xf32>
    %cst = arith.constant dense<0.000000e+00> : vector<8x128xf32>
    %2 = tpu.matmul %0, %1, %cst {dimension_numbers = #tpu.dot_dimension_numbers<[1], [0], [0], [1], [0, 0, 1, 1], [], []>} : vector<8x128xf32>, vector<128x128xf32>, vector<8x128xf32> -> vector<8x128xf32>
    %c0_3 = arith.constant 0 : index
    %c0_4 = arith.constant 0 : index
    %3 = vector.load %arg3[%c0_3, %c0_4] : memref<1x128xf32, #tpu.memory_space<vmem>>, vector<1x128xf32>
    %4 = vector.broadcast %3 : vector<1x128xf32> to vector<8x128xf32>
    %5 = arith.addf %2, %4 : vector<8x128xf32>
    %6 = math.tanh %5 : vector<8x128xf32>
    %c0_5 = arith.constant 0 : index
    %c0_6 = arith.constant 0 : index
    %7 = vector.load %arg4[%c0_5, %c0_6] : memref<128x128xf32, #tpu.memory_space<vmem>>, vector<128x128xf32>
    %cst_7 = arith.constant dense<0.000000e+00> : vector<8x128xf32>
    %8 = tpu.matmul %6, %7, %cst_7 {dimension_numbers = #tpu.dot_dimension_numbers<[1], [0], [0], [1], [0, 0, 1, 1], [], []>} : vector<8x128xf32>, vector<128x128xf32>, vector<8x128xf32> -> vector<8x128xf32>
    %c0_8 = arith.constant 0 : index
    %c0_9 = arith.constant 0 : index
    %9 = vector.load %arg5[%c0_8, %c0_9] : memref<1x128xf32, #tpu.memory_space<vmem>>, vector<1x128xf32>
    %10 = vector.broadcast %9 : vector<1x128xf32> to vector<8x128xf32>
    %11 = arith.addf %8, %10 : vector<8x128xf32>
    %12 = math.tanh %11 : vector<8x128xf32>
    %c0_10 = arith.constant 0 : index
    %c0_11 = arith.constant 0 : index
    %13 = vector.load %arg6[%c0_10, %c0_11] : memref<128x128xf32, #tpu.memory_space<vmem>>, vector<128x128xf32>
    %cst_12 = arith.constant dense<0.000000e+00> : vector<8x128xf32>
    %14 = tpu.matmul %12, %13, %cst_12 {dimension_numbers = #tpu.dot_dimension_numbers<[1], [0], [0], [1], [0, 0, 1, 1], [], []>} : vector<8x128xf32>, vector<128x128xf32>, vector<8x128xf32> -> vector<8x128xf32>
    %c0_13 = arith.constant 0 : index
    %c0_14 = arith.constant 0 : index
    %15 = vector.load %arg7[%c0_13, %c0_14] : memref<1x128xf32, #tpu.memory_space<vmem>>, vector<1x128xf32>
    %16 = vector.broadcast %15 : vector<1x128xf32> to vector<8x128xf32>
    %17 = arith.addf %14, %16 : vector<8x128xf32>
    %c0_15 = arith.constant 0 : index
    %c0_16 = arith.constant 0 : index
    %18 = vector.load %arg8[%c0_15, %c0_16] : memref<8x128xf32, #tpu.memory_space<vmem>>, vector<8x128xf32>
    tpu.vector_store %arg8[%c0_15, %c0_16], %17 {strides = array<i32>} : memref<8x128xf32, #tpu.memory_space<vmem>>, vector<8x128xf32>,
    return
  }
  func.func @transform_0(%arg0: i32) -> (i32, i32) {
    %c0_i32 = arith.constant 0 : i32
    %c0_i32_0 = arith.constant 0 : i32
    return %arg0, %c0_i32 : i32, i32
  }
  func.func @transform_1(%arg0: i32) -> (i32, i32) {
    %c0_i32 = arith.constant 0 : i32
    %c0_i32_0 = arith.constant 0 : i32
    %c0_i32_1 = arith.constant 0 : i32
    return %c0_i32, %c0_i32_0 : i32, i32
  }
  func.func @transform_2(%arg0: i32) -> (i32, i32) {
    %c0_i32 = arith.constant 0 : i32
    %c0_i32_0 = arith.constant 0 : i32
    %c0_i32_1 = arith.constant 0 : i32
    return %c0_i32, %c0_i32_0 : i32, i32
  }
  func.func @transform_3(%arg0: i32) -> (i32, i32) {
    %c0_i32 = arith.constant 0 : i32
    %c0_i32_0 = arith.constant 0 : i32
    %c0_i32_1 = arith.constant 0 : i32
    return %c0_i32, %c0_i32_0 : i32, i32
  }
  func.func @transform_4(%arg0: i32) -> (i32, i32) {
    %c0_i32 = arith.constant 0 : i32
    %c0_i32_0 = arith.constant 0 : i32
    %c0_i32_1 = arith.constant 0 : i32
    return %c0_i32, %c0_i32_0 : i32, i32
  }
  func.func @transform_5(%arg0: i32) -> (i32, i32) {
    %c0_i32 = arith.constant 0 : i32
    %c0_i32_0 = arith.constant 0 : i32
    %c0_i32_1 = arith.constant 0 : i32
    return %c0_i32, %c0_i32_0 : i32, i32
  }
  func.func @transform_6(%arg0: i32) -> (i32, i32) {
    %c0_i32 = arith.constant 0 : i32
    %c0_i32_0 = arith.constant 0 : i32
    %c0_i32_1 = arith.constant 0 : i32
    return %c0_i32, %c0_i32_0 : i32, i32
  }
  func.func @transform_7(%arg0: i32) -> (i32, i32) {
    %c0_i32 = arith.constant 0 : i32
    %c0_i32_0 = arith.constant 0 : i32
    return %arg0, %c0_i32 : i32, i32
  }
}

module attributes {stable_mosaic.version = 11 : i64} {
  func.func @kernel(%arg0: i32, %arg1: memref<8x128xf32, #tpu.memory_space<vmem>>, %arg2: memref<128x128xf32, #tpu.memory_space<vmem>>, %arg3: memref<1x128xf32, #tpu.memory_space<vmem>>, %arg4: memref<128x128xf32, #tpu.memory_space<vmem>>, %arg5: memref<1x128xf32, #tpu.memory_space<vmem>>, %arg6: memref<128x128xf32, #tpu.memory_space<vmem>>, %arg7: memref<1x128xf32, #tpu.memory_space<vmem>>, %arg8: memref<8x128xf32, #tpu.memory_space<vmem>>) attributes {dimension_semantics = [#tpu.dimension_semantics<parallel>], iteration_bounds = array<i64: 1>, scalar_prefetch = 0 : i64, scratch_operands = 0 : i64, tpu.core_type = #tpu.core_type<tc>, window_params = [{transform_indices = @transform_0, window_bounds = array<i64: 8, 128>}, {pipeline_mode = #tpu.pipeline_mode<synchronous>, transform_indices = @transform_1, window_bounds = array<i64: 128, 128>}, {pipeline_mode = #tpu.pipeline_mode<synchronous>, transform_indices = @transform_2, window_bounds = array<i64: 1, 128>}, {pipeline_mode = #tpu.pipeline_mode<synchronous>, transform_indices = @transform_3, window_bounds = array<i64: 128, 128>}, {pipeline_mode = #tpu.pipeline_mode<synchronous>, transform_indices = @transform_4, window_bounds = array<i64: 1, 128>}, {pipeline_mode = #tpu.pipeline_mode<synchronous>, transform_indices = @transform_5, window_bounds = array<i64: 128, 128>}, {pipeline_mode = #tpu.pipeline_mode<synchronous>, transform_indices = @transform_6, window_bounds = array<i64: 1, 128>}, {transform_indices = @transform_7, window_bounds = array<i64: 8, 128>}]} {
    %c0 = arith.constant 0 : index
    %c0_0 = arith.constant 0 : index
    %0 = vector.load %arg1[%c0, %c0_0] : memref<8x128xf32, #tpu.memory_space<vmem>>, vector<8x128xf32>
    %c0_1 = arith.constant 0 : index
    %c0_2 = arith.constant 0 : index
    %1 = vector.load %arg2[%c0_1, %c0_2] : memref<128x128xf32, #tpu.memory_space<vmem>>, vector<128x128xf32>
    %cst = arith.constant dense<0.000000e+00> : vector<8x128xf32>
    %2 = tpu.matmul %0, %1, %cst {dimension_numbers = #tpu.dot_dimension_numbers<[1], [0], [0], [1], [0, 0, 1, 1], [], []>} : vector<8x128xf32>, vector<128x128xf32>, vector<8x128xf32> -> vector<8x128xf32>
    %c0_3 = arith.constant 0 : index
    %c0_4 = arith.constant 0 : index
    %3 = vector.load %arg3[%c0_3, %c0_4] : memref<1x128xf32, #tpu.memory_space<vmem>>, vector<1x128xf32>
    %4 = vector.broadcast %3 : vector<1x128xf32> to vector<8x128xf32>
    %5 = arith.addf %2, %4 : vector<8x128xf32>
    %6 = math.tanh %5 : vector<8x128xf32>
    %c0_5 = arith.constant 0 : index
    %c0_6 = arith.constant 0 : index
    %7 = vector.load %arg4[%c0_5, %c0_6] : memref<128x128xf32, #tpu.memory_space<vmem>>, vector<128x128xf32>
    %cst_7 = arith.constant dense<0.000000e+00> : vector<8x128xf32>
    %8 = tpu.matmul %6, %7, %cst_7 {dimension_numbers = #tpu.dot_dimension_numbers<[1], [0], [0], [1], [0, 0, 1, 1], [], []>} : vector<8x128xf32>, vector<128x128xf32>, vector<8x128xf32> -> vector<8x128xf32>
    %c0_8 = arith.constant 0 : index
    %c0_9 = arith.constant 0 : index
    %9 = vector.load %arg5[%c0_8, %c0_9] : memref<1x128xf32, #tpu.memory_space<vmem>>, vector<1x128xf32>
    %10 = vector.broadcast %9 : vector<1x128xf32> to vector<8x128xf32>
    %11 = arith.addf %8, %10 : vector<8x128xf32>
    %12 = math.tanh %11 : vector<8x128xf32>
    %c0_10 = arith.constant 0 : index
    %c0_11 = arith.constant 0 : index
    %13 = vector.load %arg6[%c0_10, %c0_11] : memref<128x128xf32, #tpu.memory_space<vmem>>, vector<128x128xf32>
    %cst_12 = arith.constant dense<0.000000e+00> : vector<8x128xf32>
    %14 = tpu.matmul %12, %13, %cst_12 {dimension_numbers = #tpu.dot_dimension_numbers<[1], [0], [0], [1], [0, 0, 1, 1], [], []>} : vector<8x128xf32>, vector<128x128xf32>, vector<8x128xf32> -> vector<8x128xf32>
    %c0_13 = arith.constant 0 : index
    %c0_14 = arith.constant 0 : index
    %15 = vector.load %arg7[%c0_13, %c0_14] : memref<1x128xf32, #tpu.memory_space<vmem>>, vector<1x128xf32>
    %16 = vector.broadcast %15 : vector<1x128xf32> to vector<8x128xf32>
    %17 = arith.addf %14, %16 : vector<8x128xf32>
    %c0_15 = arith.constant 0 : index
    %c0_16 = arith.constant 0 : index
    %18 = vector.load %arg8[%c0_15, %c0_16] : memref<8x128xf32, #tpu.memory_space<vmem>>, vector<8x128xf32>
    tpu.vector_store %arg8[%c0_15, %c0_16], %17 {strides = array<i32>} : memref<8x128xf32, #tpu.memory_space<vmem>>, vector<8x128xf32>,
    return
  }
  func.func @transform_0(%arg0: i32) -> (i32, i32) {
    %c0_i32 = arith.constant 0 : i32
    %c0_i32_0 = arith.constant 0 : i32
    return %arg0, %c0_i32 : i32, i32
  }
  func.func @transform_1(%arg0: i32) -> (i32, i32) {
    %c0_i32 = arith.constant 0 : i32
    %c0_i32_0 = arith.constant 0 : i32
    %c0_i32_1 = arith.constant 0 : i32
    return %c0_i32, %c0_i32_0 : i32, i32
  }
  func.func @transform_2(%arg0: i32) -> (i32, i32) {
    %c0_i32 = arith.constant 0 : i32
    %c0_i32_0 = arith.constant 0 : i32
    %c0_i32_1 = arith.constant 0 : i32
    return %c0_i32, %c0_i32_0 : i32, i32
  }
  func.func @transform_3(%arg0: i32) -> (i32, i32) {
    %c0_i32 = arith.constant 0 : i32
    %c0_i32_0 = arith.constant 0 : i32
    %c0_i32_1 = arith.constant 0 : i32
    return %c0_i32, %c0_i32_0 : i32, i32
  }
  func.func @transform_4(%arg0: i32) -> (i32, i32) {
    %c0_i32 = arith.constant 0 : i32
    %c0_i32_0 = arith.constant 0 : i32
    %c0_i32_1 = arith.constant 0 : i32
    return %c0_i32, %c0_i32_0 : i32, i32
  }
  func.func @transform_5(%arg0: i32) -> (i32, i32) {
    %c0_i32 = arith.constant 0 : i32
    %c0_i32_0 = arith.constant 0 : i32
    %c0_i32_1 = arith.constant 0 : i32
    return %c0_i32, %c0_i32_0 : i32, i32
  }
  func.func @transform_6(%arg0: i32) -> (i32, i32) {
    %c0_i32 = arith.constant 0 : i32
    %c0_i32_0 = arith.constant 0 : i32
    %c0_i32_1 = arith.constant 0 : i32
    return %c0_i32, %c0_i32_0 : i32, i32
  }
  func.func @transform_7(%arg0: i32) -> (i32, i32) {
    %c0_i32 = arith.constant 0 : i32
    %c0_i32_0 = arith.constant 0 : i32
    return %arg0, %c0_i32 : i32, i32
  }
}

</mosaic_0001>

<llo_original>
// kernel: tpu_custom_call.1
$region0: #{tpu_custom_call.1}
  #allocation0 [shape = 'u32[]', space=smem, size = 0x4, offset = 0x4, fixed_abs, tag = 'smem constant byte address 0x4 - core index']
  #allocation1 [shape = 'u32[144,128]{1,0:T(1,128)}', space=vmem, size = 0x12000, scoped, tag = 'internal scratch']
  %s0 = inlined_call_operand.hbm [shape: f32[8,128], index: 0, kind: input, shape index: {}]
  %s1 = inlined_call_operand.hbm [shape: f32[128,128], index: 1, kind: input, shape index: {}]
  %s2 = inlined_call_operand.vmem [shape: f32[1,128], index: 2, kind: input, shape index: {}]
  %s3 = inlined_call_operand.hbm [shape: f32[128,128], index: 3, kind: input, shape index: {}]
  %s4 = inlined_call_operand.vmem [shape: f32[1,128], index: 4, kind: input, shape index: {}]
  %s5 = inlined_call_operand.hbm [shape: f32[128,128], index: 5, kind: input, shape index: {}]
  %s6 = inlined_call_operand.vmem [shape: f32[1,128], index: 6, kind: input, shape index: {}]
  %s7 = inlined_call_operand.hbm [shape: f32[8,128], index: 7, kind: output, shape index: {}]
  %s8 = sld [smem:[#allocation0]]
  $region54: #{tpu_custom_call.1} parent=0
    _
  %s10 = ssub.s32 1, %s8
  %s11 = scalar_select 0, %s10, %s8
  $region1: #{tpu_custom_call.1} parent=0
    #allocation2 [shape = 'u8[4096]{0}', space=vmem, size = 0x1000, scoped, tag = 'input window, operand 0, single buffered']
    #allocation3 [shape = 's32[1]{0}', space=sflag, size = 0x4, scoped, tag = 'scoped memory for tpu_custom_call.1']
    #allocation4 [shape = 's32[1]{0}', space=sflag, size = 0x4, scoped, tag = 'scoped memory for tpu_custom_call.1']
    #allocation5 [shape = 'u8[65536]{0}', space=vmem, size = 0x10000, scoped, tag = 'input window, operand 1, single buffered']
    #allocation6 [shape = 's32[1]{0}', space=sflag, size = 0x4, scoped, tag = 'scoped memory for tpu_custom_call.1']
    #allocation7 [shape = 'u8[65536]{0}', space=vmem, size = 0x10000, scoped, tag = 'input window, operand 3, single buffered']
    #allocation8 [shape = 'u8[65536]{0}', space=vmem, size = 0x10000, scoped, tag = 'input window, operand 5, single buffered']
    #allocation9 [shape = 's32[1]{0}', space=sflag, size = 0x4, scoped, tag = 'scoped memory for tpu_custom_call.1']
    #allocation10 [shape = 'u8[4096]{0}', space=vmem, size = 0x1000, scoped, tag = 'output window, operand 0, single buffered']
    %12 = vsyncpa [#allocation3], 0
    %13 = vsyncpa [#allocation6], 0
    %14 = vsyncpa [#allocation9], 0
    %15 = vsyncpa [#allocation4], 0
    // Predicated region
    $region2: #{tpu_custom_call.1} parent=1 // pred_check
      _
    $region3: #{tpu_custom_call.1} parent=1 // pred_check_branch
      %17 = sbr.rel (0) target = $region5
    $region4: #{tpu_custom_call.1} parent=1 // pred_region
      %s19 = ssub.s32 128, 128
      %20 = vsyncadd [#allocation3], %s19
      %s22 = sshll.u32 [#allocation2], 4
      %s23 = int_to_ptr.vmem [resolvable:$true] %s22
      %25 = dma.hbm_to_vmem [thread:$0]  %s0, 128, %s23, [#allocation3]
    $region5: #{tpu_custom_call.1} parent=1 // pred_fallthru
      _
    // Predicated region
    $region6: #{tpu_custom_call.1} parent=1 // pred_check
      _
    $region7: #{tpu_custom_call.1} parent=1 // pred_check_branch
      %27 = sbr.rel (0) target = $region9
    $region8: #{tpu_custom_call.1} parent=1 // pred_region
      %s29 = ssub.s32 2048, 2048
      %30 = vsyncadd [#allocation6], %s29
      %s31 = sshll.u32 [#allocation5], 4
      %s32 = int_to_ptr.vmem [resolvable:$true] %s31
      %37 = dma.hbm_to_vmem [thread:$0]  %s1, 2048, %s32, [#allocation6], 128, 128, 8
    $region9: #{tpu_custom_call.1} parent=1 // pred_fallthru
      _
    // Predicated region
    $region10: #{tpu_custom_call.1} parent=1 // pred_check
      _
    $region11: #{tpu_custom_call.1} parent=1 // pred_check_branch
      %39 = sbr.rel (0) target = $region13
    $region12: #{tpu_custom_call.1} parent=1 // pred_region
      _
    $region13: #{tpu_custom_call.1} parent=1 // pred_fallthru
      _
    // Predicated region
    $region14: #{tpu_custom_call.1} parent=1 // pred_check
      _
    $region15: #{tpu_custom_call.1} parent=1 // pred_check_branch
      %41 = sbr.rel (0) target = $region17
    $region16: #{tpu_custom_call.1} parent=1 // pred_region
      %s43 = ssub.s32 2048, 2048
      %44 = vsyncadd [#allocation6], %s43
      %s45 = sshll.u32 [#allocation7], 4
      %s46 = int_to_ptr.vmem [resolvable:$true] %s45
      %51 = dma.hbm_to_vmem [thread:$0]  %s3, 2048, %s46, [#allocation6], 128, 128, 8
    $region17: #{tpu_custom_call.1} parent=1 // pred_fallthru
      _
    // Predicated region
    $region18: #{tpu_custom_call.1} parent=1 // pred_check
      _
    $region19: #{tpu_custom_call.1} parent=1 // pred_check_branch
      %53 = sbr.rel (0) target = $region21
    $region20: #{tpu_custom_call.1} parent=1 // pred_region
      _
    $region21: #{tpu_custom_call.1} parent=1 // pred_fallthru
      _
    // Predicated region
    $region22: #{tpu_custom_call.1} parent=1 // pred_check
      _
    $region23: #{tpu_custom_call.1} parent=1 // pred_check_branch
      %55 = sbr.rel (0) target = $region25
    $region24: #{tpu_custom_call.1} parent=1 // pred_region
      %s57 = ssub.s32 2048, 2048
      %58 = vsyncadd [#allocation9], %s57
      %s59 = sshll.u32 [#allocation8], 4
      %s60 = int_to_ptr.vmem [resolvable:$true] %s59
      %65 = dma.hbm_to_vmem [thread:$0]  %s5, 2048, %s60, [#allocation9], 128, 128, 8
    $region25: #{tpu_custom_call.1} parent=1 // pred_fallthru
      _
    // Predicated region
    $region26: #{tpu_custom_call.1} parent=1 // pred_check
      _
    $region27: #{tpu_custom_call.1} parent=1 // pred_check_branch
      %67 = sbr.rel (0) target = $region29
    $region28: #{tpu_custom_call.1} parent=1 // pred_region
      _
    $region29: #{tpu_custom_call.1} parent=1 // pred_fallthru
      _
    // Predicated region
    $region30: #{tpu_custom_call.1} parent=1 // pred_check
      _
    $region31: #{tpu_custom_call.1} parent=1 // pred_check_branch
      %69 = sbr.rel (0) target = $region33
    $region32: #{tpu_custom_call.1} parent=1 // pred_region
      %70 = dma.done [#allocation3], 128
    $region33: #{tpu_custom_call.1} parent=1 // pred_fallthru
      _
    // Predicated region
    $region34: #{tpu_custom_call.1} parent=1 // pred_check
      _
    $region35: #{tpu_custom_call.1} parent=1 // pred_check_branch
      %72 = sbr.rel (0) target = $region37
    $region36: #{tpu_custom_call.1} parent=1 // pred_region
      %73 = dma.done [#allocation6], 2048
    $region37: #{tpu_custom_call.1} parent=1 // pred_fallthru
      _
    // Predicated region
    $region38: #{tpu_custom_call.1} parent=1 // pred_check
      _
    $region39: #{tpu_custom_call.1} parent=1 // pred_check_branch
      %75 = sbr.rel (0) target = $region41
    $region40: #{tpu_custom_call.1} parent=1 // pred_region
      %76 = dma.done [#allocation6], 2048
    $region41: #{tpu_custom_call.1} parent=1 // pred_fallthru
      _
    // Predicated region
    $region42: #{tpu_custom_call.1} parent=1 // pred_check
      _
    $region43: #{tpu_custom_call.1} parent=1 // pred_check_branch
      %78 = sbr.rel (0) target = $region45
    $region44: #{tpu_custom_call.1} parent=1 // pred_region
      %79 = dma.done [#allocation9], 2048
    $region45: #{tpu_custom_call.1} parent=1 // pred_fallthru
      _
    %v80 = vld [vmem:[#allocation2] sm:$0xff]
    %v81 = vld [vmem:[#allocation5] sm:$0xff]
    %v82 = vld [vmem:[#allocation5 + $0x8] sm:$0xff]
    %v83 = vld [vmem:[#allocation5 + $0x10] sm:$0xff]
    %v84 = vld [vmem:[#allocation5 + $0x18] sm:$0xff]
    %v85 = vld [vmem:[#allocation5 + $0x20] sm:$0xff]
    %v86 = vld [vmem:[#allocation5 + $0x28] sm:$0xff]
    %v87 = vld [vmem:[#allocation5 + $0x30] sm:$0xff]
    %v88 = vld [vmem:[#allocation5 + $0x38] sm:$0xff]
    %v89 = vld [vmem:[#allocation5 + $0x40] sm:$0xff]
    %v90 = vld [vmem:[#allocation5 + $0x48] sm:$0xff]
    %v91 = vld [vmem:[#allocation5 + $0x50] sm:$0xff]
    %v92 = vld [vmem:[#allocation5 + $0x58] sm:$0xff]
    %v93 = vld [vmem:[#allocation5 + $0x60] sm:$0xff]
    %v94 = vld [vmem:[#allocation5 + $0x68] sm:$0xff]
    %v95 = vld [vmem:[#allocation5 + $0x70] sm:$0xff]
    %v96 = vld [vmem:[#allocation5 + $0x78] sm:$0xff]
    %v97 = vld [vmem:[%s2] sm:$0x1]
    %v99 = vlaneseq
    %v100 = vshrl.u32 %v99, 7
    %v101 = vsub.s32 0, %v100
    %v102 = vrot.slane %v97, %v101
    %104 = vmatprep.subr.mxu0 0.0
    %105 = vmatpush1.msra.mxu0 %v81
    %106 = vmatprep.subr.mxu0 0.0
    %107 = vmatpush1.msra.mxu0 %v82
    %108 = vmatprep.subr.mxu0 0.0
    %109 = vmatpush1.msra.mxu0 %v83
    %110 = vmatprep.subr.mxu0 0.0
    %111 = vmatpush1.msra.mxu0 %v84
    %112 = vmatprep.subr.mxu0 0.0
    %113 = vmatpush1.msra.mxu0 %v85
    %114 = vmatprep.subr.mxu0 0.0
    %115 = vmatpush1.msra.mxu0 %v86
    %116 = vmatprep.subr.mxu0 0.0
    %117 = vmatpush1.msra.mxu0 %v87
    %118 = vmatprep.subr.mxu0 0.0
    %119 = vmatpush1.msra.mxu0 %v88
    %120 = vmatprep.subr.mxu0 0.0
    %121 = vmatpush1.msra.mxu0 %v89
    %122 = vmatprep.subr.mxu0 0.0
    %123 = vmatpush1.msra.mxu0 %v90
    %124 = vmatprep.subr.mxu0 0.0
    %125 = vmatpush1.msra.mxu0 %v91
    %126 = vmatprep.subr.mxu0 0.0
    %127 = vmatpush1.msra.mxu0 %v92
    %128 = vmatprep.subr.mxu0 0.0
    %129 = vmatpush1.msra.mxu0 %v93
    %130 = vmatprep.subr.mxu0 0.0
    %131 = vmatpush1.msra.mxu0 %v94
    %132 = vmatprep.subr.mxu0 0.0
    %133 = vmatpush1.msra.mxu0 %v95
    %134 = vmatprep.subr.mxu0 0.0
    %135 = vmatpush1.msra.mxu0 %v96
    %136 = vmatprep.subr.mxu0 0.0
    %137 = vmatpush1.msra.mxu0 0.0
    %138 = vmatprep.subr.mxu0 0.0
    %139 = vmatpush1.msra.mxu0 0.0
    %140 = vmatprep.subr.mxu0 0.0
    %141 = vmatpush1.msra.mxu0 0.0
    %142 = vmatprep.subr.mxu0 0.0
    %143 = vmatpush1.msra.mxu0 0.0
    %144 = vmatprep.subr.mxu0 0.0
    %145 = vmatpush1.msra.mxu0 0.0
    %146 = vmatprep.subr.mxu0 0.0
    %147 = vmatpush1.msra.mxu0 0.0
    %148 = vmatprep.subr.mxu0 0.0
    %149 = vmatpush1.msra.mxu0 0.0
    %150 = vmatprep.subr.mxu0 0.0
    %151 = vmatpush1.msra.mxu0 0.0
    %152 = vmatprep.subr.mxu0 0.0
    %153 = vmatpush1.msra.mxu0 0.0
    %154 = vmatprep.subr.mxu0 0.0
    %155 = vmatpush1.msra.mxu0 0.0
    %156 = vmatprep.subr.mxu0 0.0
    %157 = vmatpush1.msra.mxu0 0.0
    %158 = vmatprep.subr.mxu0 0.0
    %159 = vmatpush1.msra.mxu0 0.0
    %160 = vmatprep.subr.mxu0 0.0
    %161 = vmatpush1.msra.mxu0 0.0
    %162 = vmatprep.subr.mxu0 0.0
    %163 = vmatpush1.msra.mxu0 0.0
    %164 = vmatprep.subr.mxu0 0.0
    %165 = vmatpush1.msra.mxu0 0.0
    %166 = vmatprep.subr.mxu0 0.0
    %167 = vmatpush1.msra.mxu0 0.0
    %168 = vmatprep.mubr.f32.mxu0 0.0
    %169 = vmatmul.mubr.f32.gmra.mrb[0].mxu0 %v80
    %v170 = vpop.f32.mrb[0].mxu0
    %v171 = vadd.f32 %v102, %v170
    %v172 = vpop.f32.mrb[0].mxu0
    %173 = vdwg.mxu0
    %v174 = vtanh.pop %v171
    %v175 = vld [vmem:[#allocation7] sm:$0xff]
    %v176 = vld [vmem:[#allocation7 + $0x8] sm:$0xff]
    %v177 = vld [vmem:[#allocation7 + $0x10] sm:$0xff]
    %v178 = vld [vmem:[#allocation7 + $0x18] sm:$0xff]
    %v179 = vld [vmem:[#allocation7 + $0x20] sm:$0xff]
    %v180 = vld [vmem:[#allocation7 + $0x28] sm:$0xff]
    %v181 = vld [vmem:[#allocation7 + $0x30] sm:$0xff]
    %v182 = vld [vmem:[#allocation7 + $0x38] sm:$0xff]
    %v183 = vld [vmem:[#allocation7 + $0x40] sm:$0xff]
    %v184 = vld [vmem:[#allocation7 + $0x48] sm:$0xff]
    %v185 = vld [vmem:[#allocation7 + $0x50] sm:$0xff]
    %v186 = vld [vmem:[#allocation7 + $0x58] sm:$0xff]
    %v187 = vld [vmem:[#allocation7 + $0x60] sm:$0xff]
    %v188 = vld [vmem:[#allocation7 + $0x68] sm:$0xff]
    %v189 = vld [vmem:[#allocation7 + $0x70] sm:$0xff]
    %v190 = vld [vmem:[#allocation7 + $0x78] sm:$0xff]
    %v191 = vld [vmem:[%s4] sm:$0x1]
    %v193 = vlaneseq
    %v194 = vshrl.u32 %v193, 7
    %v195 = vsub.s32 0, %v194
    %v196 = vrot.slane %v191, %v195
    %198 = vmatprep.subr.mxu0 0.0
    %199 = vmatpush1.msra.mxu0 %v175
    %200 = vmatprep.subr.mxu0 0.0
    %201 = vmatpush1.msra.mxu0 %v176
    %202 = vmatprep.subr.mxu0 0.0
    %203 = vmatpush1.msra.mxu0 %v177
    %204 = vmatprep.subr.mxu0 0.0
    %205 = vmatpush1.msra.mxu0 %v178
    %206 = vmatprep.subr.mxu0 0.0
    %207 = vmatpush1.msra.mxu0 %v179
    %208 = vmatprep.subr.mxu0 0.0
    %209 = vmatpush1.msra.mxu0 %v180
    %210 = vmatprep.subr.mxu0 0.0
    %211 = vmatpush1.msra.mxu0 %v181
    %212 = vmatprep.subr.mxu0 0.0
    %213 = vmatpush1.msra.mxu0 %v182
    %214 = vmatprep.subr.mxu0 0.0
    %215 = vmatpush1.msra.mxu0 %v183
    %216 = vmatprep.subr.mxu0 0.0
    %217 = vmatpush1.msra.mxu0 %v184
    %218 = vmatprep.subr.mxu0 0.0
    %219 = vmatpush1.msra.mxu0 %v185
    %220 = vmatprep.subr.mxu0 0.0
    %221 = vmatpush1.msra.mxu0 %v186
    %222 = vmatprep.subr.mxu0 0.0
    %223 = vmatpush1.msra.mxu0 %v187
    %224 = vmatprep.subr.mxu0 0.0
    %225 = vmatpush1.msra.mxu0 %v188
    %226 = vmatprep.subr.mxu0 0.0
    %227 = vmatpush1.msra.mxu0 %v189
    %228 = vmatprep.subr.mxu0 0.0
    %229 = vmatpush1.msra.mxu0 %v190
    %230 = vmatprep.subr.mxu0 0.0
    %231 = vmatpush1.msra.mxu0 0.0
    %232 = vmatprep.subr.mxu0 0.0
    %233 = vmatpush1.msra.mxu0 0.0
    %234 = vmatprep.subr.mxu0 0.0
    %235 = vmatpush1.msra.mxu0 0.0
    %236 = vmatprep.subr.mxu0 0.0
    %237 = vmatpush1.msra.mxu0 0.0
    %238 = vmatprep.subr.mxu0 0.0
    %239 = vmatpush1.msra.mxu0 0.0
    %240 = vmatprep.subr.mxu0 0.0
    %241 = vmatpush1.msra.mxu0 0.0
    %242 = vmatprep.subr.mxu0 0.0
    %243 = vmatpush1.msra.mxu0 0.0
    %244 = vmatprep.subr.mxu0 0.0
    %245 = vmatpush1.msra.mxu0 0.0
    %246 = vmatprep.subr.mxu0 0.0
    %247 = vmatpush1.msra.mxu0 0.0
    %248 = vmatprep.subr.mxu0 0.0
    %249 = vmatpush1.msra.mxu0 0.0
    %250 = vmatprep.subr.mxu0 0.0
    %251 = vmatpush1.msra.mxu0 0.0
    %252 = vmatprep.subr.mxu0 0.0
    %253 = vmatpush1.msra.mxu0 0.0
    %254 = vmatprep.subr.mxu0 0.0
    %255 = vmatpush1.msra.mxu0 0.0
    %256 = vmatprep.subr.mxu0 0.0
    %257 = vmatpush1.msra.mxu0 0.0
    %258 = vmatprep.subr.mxu0 0.0
    %259 = vmatpush1.msra.mxu0 0.0
    %260 = vmatprep.subr.mxu0 0.0
    %261 = vmatpush1.msra.mxu0 0.0
    %262 = vmatprep.mubr.f32.mxu0 0.0
    %263 = vmatmul.mubr.f32.gmra.mrb[0].mxu0 %v174
    %v264 = vpop.f32.mrb[0].mxu0
    %v265 = vadd.f32 %v196, %v264
    %v266 = vpop.f32.mrb[0].mxu0
    %267 = vdwg.mxu0
    %v268 = vtanh.pop %v265
    %v269 = vld [vmem:[#allocation8] sm:$0xff]
    %v270 = vld [vmem:[#allocation8 + $0x8] sm:$0xff]
    %v271 = vld [vmem:[#allocation8 + $0x10] sm:$0xff]
    %v272 = vld [vmem:[#allocation8 + $0x18] sm:$0xff]
    %v273 = vld [vmem:[#allocation8 + $0x20] sm:$0xff]
    %v274 = vld [vmem:[#allocation8 + $0x28] sm:$0xff]
    %v275 = vld [vmem:[#allocation8 + $0x30] sm:$0xff]
    %v276 = vld [vmem:[#allocation8 + $0x38] sm:$0xff]
    %v277 = vld [vmem:[#allocation8 + $0x40] sm:$0xff]
    %v278 = vld [vmem:[#allocation8 + $0x48] sm:$0xff]
    %v279 = vld [vmem:[#allocation8 + $0x50] sm:$0xff]
    %v280 = vld [vmem:[#allocation8 + $0x58] sm:$0xff]
    %v281 = vld [vmem:[#allocation8 + $0x60] sm:$0xff]
    %v282 = vld [vmem:[#allocation8 + $0x68] sm:$0xff]
    %v283 = vld [vmem:[#allocation8 + $0x70] sm:$0xff]
    %v284 = vld [vmem:[#allocation8 + $0x78] sm:$0xff]
    %v285 = vld [vmem:[%s6] sm:$0x1]
    %v287 = vlaneseq
    %v288 = vshrl.u32 %v287, 7
    %v289 = vsub.s32 0, %v288
    %v290 = vrot.slane %v285, %v289
    %292 = vmatprep.subr.mxu0 0.0
    %293 = vmatpush1.msra.mxu0 %v269
    %294 = vmatprep.subr.mxu0 0.0
    %295 = vmatpush1.msra.mxu0 %v270
    %296 = vmatprep.subr.mxu0 0.0
    %297 = vmatpush1.msra.mxu0 %v271
    %298 = vmatprep.subr.mxu0 0.0
    %299 = vmatpush1.msra.mxu0 %v272
    %300 = vmatprep.subr.mxu0 0.0
    %301 = vmatpush1.msra.mxu0 %v273
    %302 = vmatprep.subr.mxu0 0.0
    %303 = vmatpush1.msra.mxu0 %v274
    %304 = vmatprep.subr.mxu0 0.0
    %305 = vmatpush1.msra.mxu0 %v275
    %306 = vmatprep.subr.mxu0 0.0
    %307 = vmatpush1.msra.mxu0 %v276
    %308 = vmatprep.subr.mxu0 0.0
    %309 = vmatpush1.msra.mxu0 %v277
    %310 = vmatprep.subr.mxu0 0.0
    %311 = vmatpush1.msra.mxu0 %v278
    %312 = vmatprep.subr.mxu0 0.0
    %313 = vmatpush1.msra.mxu0 %v279
    %314 = vmatprep.subr.mxu0 0.0
    %315 = vmatpush1.msra.mxu0 %v280
    %316 = vmatprep.subr.mxu0 0.0
    %317 = vmatpush1.msra.mxu0 %v281
    %318 = vmatprep.subr.mxu0 0.0
    %319 = vmatpush1.msra.mxu0 %v282
    %320 = vmatprep.subr.mxu0 0.0
    %321 = vmatpush1.msra.mxu0 %v283
    %322 = vmatprep.subr.mxu0 0.0
    %323 = vmatpush1.msra.mxu0 %v284
    %324 = vmatprep.subr.mxu0 0.0
    %325 = vmatpush1.msra.mxu0 0.0
    %326 = vmatprep.subr.mxu0 0.0
    %327 = vmatpush1.msra.mxu0 0.0
    %328 = vmatprep.subr.mxu0 0.0
    %329 = vmatpush1.msra.mxu0 0.0
    %330 = vmatprep.subr.mxu0 0.0
    %331 = vmatpush1.msra.mxu0 0.0
    %332 = vmatprep.subr.mxu0 0.0
    %333 = vmatpush1.msra.mxu0 0.0
    %334 = vmatprep.subr.mxu0 0.0
    %335 = vmatpush1.msra.mxu0 0.0
    %336 = vmatprep.subr.mxu0 0.0
    %337 = vmatpush1.msra.mxu0 0.0
    %338 = vmatprep.subr.mxu0 0.0
    %339 = vmatpush1.msra.mxu0 0.0
    %340 = vmatprep.subr.mxu0 0.0
    %341 = vmatpush1.msra.mxu0 0.0
    %342 = vmatprep.subr.mxu0 0.0
    %343 = vmatpush1.msra.mxu0 0.0
    %344 = vmatprep.subr.mxu0 0.0
    %345 = vmatpush1.msra.mxu0 0.0
    %346 = vmatprep.subr.mxu0 0.0
    %347 = vmatpush1.msra.mxu0 0.0
    %348 = vmatprep.subr.mxu0 0.0
    %349 = vmatpush1.msra.mxu0 0.0
    %350 = vmatprep.subr.mxu0 0.0
    %351 = vmatpush1.msra.mxu0 0.0
    %352 = vmatprep.subr.mxu0 0.0
    %353 = vmatpush1.msra.mxu0 0.0
    %354 = vmatprep.subr.mxu0 0.0
    %355 = vmatpush1.msra.mxu0 0.0
    %356 = vmatprep.mubr.f32.mxu0 0.0
    %357 = vmatmul.mubr.f32.gmra.mrb[0].mxu0 %v268
    %v358 = vpop.f32.mrb[0].mxu0
    %v359 = vadd.f32 %v290, %v358
    %v360 = vpop.f32.mrb[0].mxu0
    %361 = vdwg.mxu0
    %362 = vst [vmem:[#allocation10] sm:$0xff] %v359
    // Predicated region
    $region46: #{tpu_custom_call.1} parent=1 // pred_check
      _
    $region47: #{tpu_custom_call.1} parent=1 // pred_check_branch
      %364 = sbr.rel (0) target = $region49
    $region48: #{tpu_custom_call.1} parent=1 // pred_region
      %s366 = ssub.s32 128, 128
      %367 = vsyncadd [#allocation4], %s366
      %s369 = sshll.u32 [#allocation10], 4
      %s370 = int_to_ptr.vmem [resolvable:$true] %s369
      %372 = dma.vmem_to_hbm [thread:$0]  %s370, 128, %s7, [#allocation4]
    $region49: #{tpu_custom_call.1} parent=1 // pred_fallthru
      _
    // Predicated region
    $region50: #{tpu_custom_call.1} parent=1 // pred_check
      _
    $region51: #{tpu_custom_call.1} parent=1 // pred_check_branch
      %374 = sbr.rel (0) target = $region53
    $region52: #{tpu_custom_call.1} parent=1 // pred_region
      %375 = dma.done [#allocation4], 128
    $region53: #{tpu_custom_call.1} parent=1 // pred_fallthru
      _
    %376 = vsyncpa [#allocation3], 1
    %377 = vsyncpa [#allocation6], 1
    %378 = vsyncpa [#allocation9], 1
    %379 = vsyncpa [#allocation4], 1

// kernel: tpu_custom_call.1
$region0: #{tpu_custom_call.1}
  #allocation0 [shape = 'u32[]', space=smem, size = 0x4, offset = 0x4, fixed_abs, tag = 'smem constant byte address 0x4 - core index']
  #allocation1 [shape = 'u32[144,128]{1,0:T(1,128)}', space=vmem, size = 0x12000, scoped, tag = 'internal scratch']
  %s0 = inlined_call_operand.hbm [shape: f32[8,128], index: 0, kind: input, shape index: {}]
  %s1 = inlined_call_operand.hbm [shape: f32[128,128], index: 1, kind: input, shape index: {}]
  %s2 = inlined_call_operand.vmem [shape: f32[1,128], index: 2, kind: input, shape index: {}]
  %s3 = inlined_call_operand.hbm [shape: f32[128,128], index: 3, kind: input, shape index: {}]
  %s4 = inlined_call_operand.vmem [shape: f32[1,128], index: 4, kind: input, shape index: {}]
  %s5 = inlined_call_operand.hbm [shape: f32[128,128], index: 5, kind: input, shape index: {}]
  %s6 = inlined_call_operand.vmem [shape: f32[1,128], index: 6, kind: input, shape index: {}]
  %s7 = inlined_call_operand.hbm [shape: f32[8,128], index: 7, kind: output, shape index: {}]
  %s8 = sld [smem:[#allocation0]]
  $region54: #{tpu_custom_call.1} parent=0
    _
  %s10 = ssub.s32 1, %s8
  %s11 = scalar_select 0, %s10, %s8
  $region1: #{tpu_custom_call.1} parent=0
    #allocation2 [shape = 'u8[4096]{0}', space=vmem, size = 0x1000, scoped, tag = 'input window, operand 0, single buffered']
    #allocation3 [shape = 's32[1]{0}', space=sflag, size = 0x4, scoped, tag = 'scoped memory for tpu_custom_call.1']
    #allocation4 [shape = 's32[1]{0}', space=sflag, size = 0x4, scoped, tag = 'scoped memory for tpu_custom_call.1']
    #allocation5 [shape = 'u8[65536]{0}', space=vmem, size = 0x10000, scoped, tag = 'input window, operand 1, single buffered']
    #allocation6 [shape = 's32[1]{0}', space=sflag, size = 0x4, scoped, tag = 'scoped memory for tpu_custom_call.1']
    #allocation7 [shape = 'u8[65536]{0}', space=vmem, size = 0x10000, scoped, tag = 'input window, operand 3, single buffered']
    #allocation8 [shape = 'u8[65536]{0}', space=vmem, size = 0x10000, scoped, tag = 'input window, operand 5, single buffered']
    #allocation9 [shape = 's32[1]{0}', space=sflag, size = 0x4, scoped, tag = 'scoped memory for tpu_custom_call.1']
    #allocation10 [shape = 'u8[4096]{0}', space=vmem, size = 0x1000, scoped, tag = 'output window, operand 0, single buffered']
    %12 = vsyncpa [#allocation3], 0
    %13 = vsyncpa [#allocation6], 0
    %14 = vsyncpa [#allocation9], 0
    %15 = vsyncpa [#allocation4], 0
    // Predicated region
    $region2: #{tpu_custom_call.1} parent=1 // pred_check
      _
    $region3: #{tpu_custom_call.1} parent=1 // pred_check_branch
      %17 = sbr.rel (0) target = $region5
    $region4: #{tpu_custom_call.1} parent=1 // pred_region
      %s19 = ssub.s32 128, 128
      %20 = vsyncadd [#allocation3], %s19
      %s22 = sshll.u32 [#allocation2], 4
      %s23 = int_to_ptr.vmem [resolvable:$true] %s22
      %25 = dma.hbm_to_vmem [thread:$0]  %s0, 128, %s23, [#allocation3]
    $region5: #{tpu_custom_call.1} parent=1 // pred_fallthru
      _
    // Predicated region
    $region6: #{tpu_custom_call.1} parent=1 // pred_check
      _
    $region7: #{tpu_custom_call.1} parent=1 // pred_check_branch
      %27 = sbr.rel (0) target = $region9
    $region8: #{tpu_custom_call.1} parent=1 // pred_region
      %s29 = ssub.s32 2048, 2048
      %30 = vsyncadd [#allocation6], %s29
      %s31 = sshll.u32 [#allocation5], 4
      %s32 = int_to_ptr.vmem [resolvable:$true] %s31
      %37 = dma.hbm_to_vmem [thread:$0]  %s1, 2048, %s32, [#allocation6], 128, 128, 8
    $region9: #{tpu_custom_call.1} parent=1 // pred_fallthru
      _
    // Predicated region
    $region10: #{tpu_custom_call.1} parent=1 // pred_check
      _
    $region11: #{tpu_custom_call.1} parent=1 // pred_check_branch
      %39 = sbr.rel (0) target = $region13
    $region12: #{tpu_custom_call.1} parent=1 // pred_region
      _
    $region13: #{tpu_custom_call.1} parent=1 // pred_fallthru
      _
    // Predicated region
    $region14: #{tpu_custom_call.1} parent=1 // pred_check
      _
    $region15: #{tpu_custom_call.1} parent=1 // pred_check_branch
      %41 = sbr.rel (0) target = $region17
    $region16: #{tpu_custom_call.1} parent=1 // pred_region
      %s43 = ssub.s32 2048, 2048
      %44 = vsyncadd [#allocation6], %s43
      %s45 = sshll.u32 [#allocation7], 4
      %s46 = int_to_ptr.vmem [resolvable:$true] %s45
      %51 = dma.hbm_to_vmem [thread:$0]  %s3, 2048, %s46, [#allocation6], 128, 128, 8
    $region17: #{tpu_custom_call.1} parent=1 // pred_fallthru
      _
    // Predicated region
    $region18: #{tpu_custom_call.1} parent=1 // pred_check
      _
    $region19: #{tpu_custom_call.1} parent=1 // pred_check_branch
      %53 = sbr.rel (0) target = $region21
    $region20: #{tpu_custom_call.1} parent=1 // pred_region
      _
    $region21: #{tpu_custom_call.1} parent=1 // pred_fallthru
      _
    // Predicated region
    $region22: #{tpu_custom_call.1} parent=1 // pred_check
      _
    $region23: #{tpu_custom_call.1} parent=1 // pred_check_branch
      %55 = sbr.rel (0) target = $region25
    $region24: #{tpu_custom_call.1} parent=1 // pred_region
      %s57 = ssub.s32 2048, 2048
      %58 = vsyncadd [#allocation9], %s57
      %s59 = sshll.u32 [#allocation8], 4
      %s60 = int_to_ptr.vmem [resolvable:$true] %s59
      %65 = dma.hbm_to_vmem [thread:$0]  %s5, 2048, %s60, [#allocation9], 128, 128, 8
    $region25: #{tpu_custom_call.1} parent=1 // pred_fallthru
      _
    // Predicated region
    $region26: #{tpu_custom_call.1} parent=1 // pred_check
      _
    $region27: #{tpu_custom_call.1} parent=1 // pred_check_branch
      %67 = sbr.rel (0) target = $region29
    $region28: #{tpu_custom_call.1} parent=1 // pred_region
      _
    $region29: #{tpu_custom_call.1} parent=1 // pred_fallthru
      _
    // Predicated region
    $region30: #{tpu_custom_call.1} parent=1 // pred_check
      _
    $region31: #{tpu_custom_call.1} parent=1 // pred_check_branch
      %69 = sbr.rel (0) target = $region33
    $region32: #{tpu_custom_call.1} parent=1 // pred_region
      %70 = dma.done [#allocation3], 128
    $region33: #{tpu_custom_call.1} parent=1 // pred_fallthru
      _
    // Predicated region
    $region34: #{tpu_custom_call.1} parent=1 // pred_check
      _
    $region35: #{tpu_custom_call.1} parent=1 // pred_check_branch
      %72 = sbr.rel (0) target = $region37
    $region36: #{tpu_custom_call.1} parent=1 // pred_region
      %73 = dma.done [#allocation6], 2048
    $region37: #{tpu_custom_call.1} parent=1 // pred_fallthru
      _
    // Predicated region
    $region38: #{tpu_custom_call.1} parent=1 // pred_check
      _
    $region39: #{tpu_custom_call.1} parent=1 // pred_check_branch
      %75 = sbr.rel (0) target = $region41
    $region40: #{tpu_custom_call.1} parent=1 // pred_region
      %76 = dma.done [#allocation6], 2048
    $region41: #{tpu_custom_call.1} parent=1 // pred_fallthru
      _
    // Predicated region
    $region42: #{tpu_custom_call.1} parent=1 // pred_check
      _
    $region43: #{tpu_custom_call.1} parent=1 // pred_check_branch
      %78 = sbr.rel (0) target = $region45
    $region44: #{tpu_custom_call.1} parent=1 // pred_region
      %79 = dma.done [#allocation9], 2048
    $region45: #{tpu_custom_call.1} parent=1 // pred_fallthru
      _
    %v80 = vld [vmem:[#allocation2] sm:$0xff]
    %v81 = vld [vmem:[#allocation5] sm:$0xff]
    %v82 = vld [vmem:[#allocation5 + $0x8] sm:$0xff]
    %v83 = vld [vmem:[#allocation5 + $0x10] sm:$0xff]
    %v84 = vld [vmem:[#allocation5 + $0x18] sm:$0xff]
    %v85 = vld [vmem:[#allocation5 + $0x20] sm:$0xff]
    %v86 = vld [vmem:[#allocation5 + $0x28] sm:$0xff]
    %v87 = vld [vmem:[#allocation5 + $0x30] sm:$0xff]
    %v88 = vld [vmem:[#allocation5 + $0x38] sm:$0xff]
    %v89 = vld [vmem:[#allocation5 + $0x40] sm:$0xff]
    %v90 = vld [vmem:[#allocation5 + $0x48] sm:$0xff]
    %v91 = vld [vmem:[#allocation5 + $0x50] sm:$0xff]
    %v92 = vld [vmem:[#allocation5 + $0x58] sm:$0xff]
    %v93 = vld [vmem:[#allocation5 + $0x60] sm:$0xff]
    %v94 = vld [vmem:[#allocation5 + $0x68] sm:$0xff]
    %v95 = vld [vmem:[#allocation5 + $0x70] sm:$0xff]
    %v96 = vld [vmem:[#allocation5 + $0x78] sm:$0xff]
    %v97 = vld [vmem:[%s2] sm:$0x1]
    %v99 = vlaneseq
    %v100 = vshrl.u32 %v99, 7
    %v101 = vsub.s32 0, %v100
    %v102 = vrot.slane %v97, %v101
    %104 = vmatprep.subr.mxu0 0.0
    %105 = vmatpush1.msra.mxu0 %v81
    %106 = vmatprep.subr.mxu0 0.0
    %107 = vmatpush1.msra.mxu0 %v82
    %108 = vmatprep.subr.mxu0 0.0
    %109 = vmatpush1.msra.mxu0 %v83
    %110 = vmatprep.subr.mxu0 0.0
    %111 = vmatpush1.msra.mxu0 %v84
    %112 = vmatprep.subr.mxu0 0.0
    %113 = vmatpush1.msra.mxu0 %v85
    %114 = vmatprep.subr.mxu0 0.0
    %115 = vmatpush1.msra.mxu0 %v86
    %116 = vmatprep.subr.mxu0 0.0
    %117 = vmatpush1.msra.mxu0 %v87
    %118 = vmatprep.subr.mxu0 0.0
    %119 = vmatpush1.msra.mxu0 %v88
    %120 = vmatprep.subr.mxu0 0.0
    %121 = vmatpush1.msra.mxu0 %v89
    %122 = vmatprep.subr.mxu0 0.0
    %123 = vmatpush1.msra.mxu0 %v90
    %124 = vmatprep.subr.mxu0 0.0
    %125 = vmatpush1.msra.mxu0 %v91
    %126 = vmatprep.subr.mxu0 0.0
    %127 = vmatpush1.msra.mxu0 %v92
    %128 = vmatprep.subr.mxu0 0.0
    %129 = vmatpush1.msra.mxu0 %v93
    %130 = vmatprep.subr.mxu0 0.0
    %131 = vmatpush1.msra.mxu0 %v94
    %132 = vmatprep.subr.mxu0 0.0
    %133 = vmatpush1.msra.mxu0 %v95
    %134 = vmatprep.subr.mxu0 0.0
    %135 = vmatpush1.msra.mxu0 %v96
    %136 = vmatprep.subr.mxu0 0.0
    %137 = vmatpush1.msra.mxu0 0.0
    %138 = vmatprep.subr.mxu0 0.0
    %139 = vmatpush1.msra.mxu0 0.0
    %140 = vmatprep.subr.mxu0 0.0
    %141 = vmatpush1.msra.mxu0 0.0
    %142 = vmatprep.subr.mxu0 0.0
    %143 = vmatpush1.msra.mxu0 0.0
    %144 = vmatprep.subr.mxu0 0.0
    %145 = vmatpush1.msra.mxu0 0.0
    %146 = vmatprep.subr.mxu0 0.0
    %147 = vmatpush1.msra.mxu0 0.0
    %148 = vmatprep.subr.mxu0 0.0
    %149 = vmatpush1.msra.mxu0 0.0
    %150 = vmatprep.subr.mxu0 0.0
    %151 = vmatpush1.msra.mxu0 0.0
    %152 = vmatprep.subr.mxu0 0.0
    %153 = vmatpush1.msra.mxu0 0.0
    %154 = vmatprep.subr.mxu0 0.0
    %155 = vmatpush1.msra.mxu0 0.0
    %156 = vmatprep.subr.mxu0 0.0
    %157 = vmatpush1.msra.mxu0 0.0
    %158 = vmatprep.subr.mxu0 0.0
    %159 = vmatpush1.msra.mxu0 0.0
    %160 = vmatprep.subr.mxu0 0.0
    %161 = vmatpush1.msra.mxu0 0.0
    %162 = vmatprep.subr.mxu0 0.0
    %163 = vmatpush1.msra.mxu0 0.0
    %164 = vmatprep.subr.mxu0 0.0
    %165 = vmatpush1.msra.mxu0 0.0
    %166 = vmatprep.subr.mxu0 0.0
    %167 = vmatpush1.msra.mxu0 0.0
    %168 = vmatprep.mubr.f32.mxu0 0.0
    %169 = vmatmul.mubr.f32.gmra.mrb[0].mxu0 %v80
    %v170 = vpop.f32.mrb[0].mxu0
    %v171 = vadd.f32 %v102, %v170
    %v172 = vpop.f32.mrb[0].mxu0
    %173 = vdwg.mxu0
    %v174 = vtanh.pop %v171
    %v175 = vld [vmem:[#allocation7] sm:$0xff]
    %v176 = vld [vmem:[#allocation7 + $0x8] sm:$0xff]
    %v177 = vld [vmem:[#allocation7 + $0x10] sm:$0xff]
    %v178 = vld [vmem:[#allocation7 + $0x18] sm:$0xff]
    %v179 = vld [vmem:[#allocation7 + $0x20] sm:$0xff]
    %v180 = vld [vmem:[#allocation7 + $0x28] sm:$0xff]
    %v181 = vld [vmem:[#allocation7 + $0x30] sm:$0xff]
    %v182 = vld [vmem:[#allocation7 + $0x38] sm:$0xff]
    %v183 = vld [vmem:[#allocation7 + $0x40] sm:$0xff]
    %v184 = vld [vmem:[#allocation7 + $0x48] sm:$0xff]
    %v185 = vld [vmem:[#allocation7 + $0x50] sm:$0xff]
    %v186 = vld [vmem:[#allocation7 + $0x58] sm:$0xff]
    %v187 = vld [vmem:[#allocation7 + $0x60] sm:$0xff]
    %v188 = vld [vmem:[#allocation7 + $0x68] sm:$0xff]
    %v189 = vld [vmem:[#allocation7 + $0x70] sm:$0xff]
    %v190 = vld [vmem:[#allocation7 + $0x78] sm:$0xff]
    %v191 = vld [vmem:[%s4] sm:$0x1]
    %v193 = vlaneseq
    %v194 = vshrl.u32 %v193, 7
    %v195 = vsub.s32 0, %v194
    %v196 = vrot.slane %v191, %v195
    %198 = vmatprep.subr.mxu0 0.0
    %199 = vmatpush1.msra.mxu0 %v175
    %200 = vmatprep.subr.mxu0 0.0
    %201 = vmatpush1.msra.mxu0 %v176
    %202 = vmatprep.subr.mxu0 0.0
    %203 = vmatpush1.msra.mxu0 %v177
    %204 = vmatprep.subr.mxu0 0.0
    %205 = vmatpush1.msra.mxu0 %v178
    %206 = vmatprep.subr.mxu0 0.0
    %207 = vmatpush1.msra.mxu0 %v179
    %208 = vmatprep.subr.mxu0 0.0
    %209 = vmatpush1.msra.mxu0 %v180
    %210 = vmatprep.subr.mxu0 0.0
    %211 = vmatpush1.msra.mxu0 %v181
    %212 = vmatprep.subr.mxu0 0.0
    %213 = vmatpush1.msra.mxu0 %v182
    %214 = vmatprep.subr.mxu0 0.0
    %215 = vmatpush1.msra.mxu0 %v183
    %216 = vmatprep.subr.mxu0 0.0
    %217 = vmatpush1.msra.mxu0 %v184
    %218 = vmatprep.subr.mxu0 0.0
    %219 = vmatpush1.msra.mxu0 %v185
    %220 = vmatprep.subr.mxu0 0.0
    %221 = vmatpush1.msra.mxu0 %v186
    %222 = vmatprep.subr.mxu0 0.0
    %223 = vmatpush1.msra.mxu0 %v187
    %224 = vmatprep.subr.mxu0 0.0
    %225 = vmatpush1.msra.mxu0 %v188
    %226 = vmatprep.subr.mxu0 0.0
    %227 = vmatpush1.msra.mxu0 %v189
    %228 = vmatprep.subr.mxu0 0.0
    %229 = vmatpush1.msra.mxu0 %v190
    %230 = vmatprep.subr.mxu0 0.0
    %231 = vmatpush1.msra.mxu0 0.0
    %232 = vmatprep.subr.mxu0 0.0
    %233 = vmatpush1.msra.mxu0 0.0
    %234 = vmatprep.subr.mxu0 0.0
    %235 = vmatpush1.msra.mxu0 0.0
    %236 = vmatprep.subr.mxu0 0.0
    %237 = vmatpush1.msra.mxu0 0.0
    %238 = vmatprep.subr.mxu0 0.0
    %239 = vmatpush1.msra.mxu0 0.0
    %240 = vmatprep.subr.mxu0 0.0
    %241 = vmatpush1.msra.mxu0 0.0
    %242 = vmatprep.subr.mxu0 0.0
    %243 = vmatpush1.msra.mxu0 0.0
    %244 = vmatprep.subr.mxu0 0.0
    %245 = vmatpush1.msra.mxu0 0.0
    %246 = vmatprep.subr.mxu0 0.0
    %247 = vmatpush1.msra.mxu0 0.0
    %248 = vmatprep.subr.mxu0 0.0
    %249 = vmatpush1.msra.mxu0 0.0
    %250 = vmatprep.subr.mxu0 0.0
    %251 = vmatpush1.msra.mxu0 0.0
    %252 = vmatprep.subr.mxu0 0.0
    %253 = vmatpush1.msra.mxu0 0.0
    %254 = vmatprep.subr.mxu0 0.0
    %255 = vmatpush1.msra.mxu0 0.0
    %256 = vmatprep.subr.mxu0 0.0
    %257 = vmatpush1.msra.mxu0 0.0
    %258 = vmatprep.subr.mxu0 0.0
    %259 = vmatpush1.msra.mxu0 0.0
    %260 = vmatprep.subr.mxu0 0.0
    %261 = vmatpush1.msra.mxu0 0.0
    %262 = vmatprep.mubr.f32.mxu0 0.0
    %263 = vmatmul.mubr.f32.gmra.mrb[0].mxu0 %v174
    %v264 = vpop.f32.mrb[0].mxu0
    %v265 = vadd.f32 %v196, %v264
    %v266 = vpop.f32.mrb[0].mxu0
    %267 = vdwg.mxu0
    %v268 = vtanh.pop %v265
    %v269 = vld [vmem:[#allocation8] sm:$0xff]
    %v270 = vld [vmem:[#allocation8 + $0x8] sm:$0xff]
    %v271 = vld [vmem:[#allocation8 + $0x10] sm:$0xff]
    %v272 = vld [vmem:[#allocation8 + $0x18] sm:$0xff]
    %v273 = vld [vmem:[#allocation8 + $0x20] sm:$0xff]
    %v274 = vld [vmem:[#allocation8 + $0x28] sm:$0xff]
    %v275 = vld [vmem:[#allocation8 + $0x30] sm:$0xff]
    %v276 = vld [vmem:[#allocation8 + $0x38] sm:$0xff]
    %v277 = vld [vmem:[#allocation8 + $0x40] sm:$0xff]
    %v278 = vld [vmem:[#allocation8 + $0x48] sm:$0xff]
    %v279 = vld [vmem:[#allocation8 + $0x50] sm:$0xff]
    %v280 = vld [vmem:[#allocation8 + $0x58] sm:$0xff]
    %v281 = vld [vmem:[#allocation8 + $0x60] sm:$0xff]
    %v282 = vld [vmem:[#allocation8 + $0x68] sm:$0xff]
    %v283 = vld [vmem:[#allocation8 + $0x70] sm:$0xff]
    %v284 = vld [vmem:[#allocation8 + $0x78] sm:$0xff]
    %v285 = vld [vmem:[%s6] sm:$0x1]
    %v287 = vlaneseq
    %v288 = vshrl.u32 %v287, 7
    %v289 = vsub.s32 0, %v288
    %v290 = vrot.slane %v285, %v289
    %292 = vmatprep.subr.mxu0 0.0
    %293 = vmatpush1.msra.mxu0 %v269
    %294 = vmatprep.subr.mxu0 0.0
    %295 = vmatpush1.msra.mxu0 %v270
    %296 = vmatprep.subr.mxu0 0.0
    %297 = vmatpush1.msra.mxu0 %v271
    %298 = vmatprep.subr.mxu0 0.0
    %299 = vmatpush1.msra.mxu0 %v272
    %300 = vmatprep.subr.mxu0 0.0
    %301 = vmatpush1.msra.mxu0 %v273
    %302 = vmatprep.subr.mxu0 0.0
    %303 = vmatpush1.msra.mxu0 %v274
    %304 = vmatprep.subr.mxu0 0.0
    %305 = vmatpush1.msra.mxu0 %v275
    %306 = vmatprep.subr.mxu0 0.0
    %307 = vmatpush1.msra.mxu0 %v276
    %308 = vmatprep.subr.mxu0 0.0
    %309 = vmatpush1.msra.mxu0 %v277
    %310 = vmatprep.subr.mxu0 0.0
    %311 = vmatpush1.msra.mxu0 %v278
    %312 = vmatprep.subr.mxu0 0.0
    %313 = vmatpush1.msra.mxu0 %v279
    %314 = vmatprep.subr.mxu0 0.0
    %315 = vmatpush1.msra.mxu0 %v280
    %316 = vmatprep.subr.mxu0 0.0
    %317 = vmatpush1.msra.mxu0 %v281
    %318 = vmatprep.subr.mxu0 0.0
    %319 = vmatpush1.msra.mxu0 %v282
    %320 = vmatprep.subr.mxu0 0.0
    %321 = vmatpush1.msra.mxu0 %v283
    %322 = vmatprep.subr.mxu0 0.0
    %323 = vmatpush1.msra.mxu0 %v284
    %324 = vmatprep.subr.mxu0 0.0
    %325 = vmatpush1.msra.mxu0 0.0
    %326 = vmatprep.subr.mxu0 0.0
    %327 = vmatpush1.msra.mxu0 0.0
    %328 = vmatprep.subr.mxu0 0.0
    %329 = vmatpush1.msra.mxu0 0.0
    %330 = vmatprep.subr.mxu0 0.0
    %331 = vmatpush1.msra.mxu0 0.0
    %332 = vmatprep.subr.mxu0 0.0
    %333 = vmatpush1.msra.mxu0 0.0
    %334 = vmatprep.subr.mxu0 0.0
    %335 = vmatpush1.msra.mxu0 0.0
    %336 = vmatprep.subr.mxu0 0.0
    %337 = vmatpush1.msra.mxu0 0.0
    %338 = vmatprep.subr.mxu0 0.0
    %339 = vmatpush1.msra.mxu0 0.0
    %340 = vmatprep.subr.mxu0 0.0
    %341 = vmatpush1.msra.mxu0 0.0
    %342 = vmatprep.subr.mxu0 0.0
    %343 = vmatpush1.msra.mxu0 0.0
    %344 = vmatprep.subr.mxu0 0.0
    %345 = vmatpush1.msra.mxu0 0.0
    %346 = vmatprep.subr.mxu0 0.0
    %347 = vmatpush1.msra.mxu0 0.0
    %348 = vmatprep.subr.mxu0 0.0
    %349 = vmatpush1.msra.mxu0 0.0
    %350 = vmatprep.subr.mxu0 0.0
    %351 = vmatpush1.msra.mxu0 0.0
    %352 = vmatprep.subr.mxu0 0.0
    %353 = vmatpush1.msra.mxu0 0.0
    %354 = vmatprep.subr.mxu0 0.0
    %355 = vmatpush1.msra.mxu0 0.0
    %356 = vmatprep.mubr.f32.mxu0 0.0
    %357 = vmatmul.mubr.f32.gmra.mrb[0].mxu0 %v268
    %v358 = vpop.f32.mrb[0].mxu0
    %v359 = vadd.f32 %v290, %v358
    %v360 = vpop.f32.mrb[0].mxu0
    %361 = vdwg.mxu0
    %362 = vst [vmem:[#allocation10] sm:$0xff] %v359
    // Predicated region
    $region46: #{tpu_custom_call.1} parent=1 // pred_check
      _
    $region47: #{tpu_custom_call.1} parent=1 // pred_check_branch
      %364 = sbr.rel (0) target = $region49
    $region48: #{tpu_custom_call.1} parent=1 // pred_region
      %s366 = ssub.s32 128, 128
      %367 = vsyncadd [#allocation4], %s366
      %s369 = sshll.u32 [#allocation10], 4
      %s370 = int_to_ptr.vmem [resolvable:$true] %s369
      %372 = dma.vmem_to_hbm [thread:$0]  %s370, 128, %s7, [#allocation4]
    $region49: #{tpu_custom_call.1} parent=1 // pred_fallthru
      _
    // Predicated region
    $region50: #{tpu_custom_call.1} parent=1 // pred_check
      _
    $region51: #{tpu_custom_call.1} parent=1 // pred_check_branch
      %374 = sbr.rel (0) target = $region53
    $region52: #{tpu_custom_call.1} parent=1 // pred_region
      %375 = dma.done [#allocation4], 128
    $region53: #{tpu_custom_call.1} parent=1 // pred_fallthru
      _
    %376 = vsyncpa [#allocation3], 1
    %377 = vsyncpa [#allocation6], 1
    %378 = vsyncpa [#allocation9], 1
    %379 = vsyncpa [#allocation4], 1

</llo_original>
